<compile_context>
chip_gen: v5e
topology: v5e:2x2
jax: 0.10.0
libtpu: 0.0.40
codegen_flags: <defaults>
</compile_context>

<pallas_src>
import functools

import jax
import jax.numpy as jnp
from jax.experimental import pallas as pl
from jax.experimental.pallas import tpu as pltpu


# ---------------------------------------------------------------------------
# in-kernel stateless PRNG (portable: plain jnp/lax ops only)
# ---------------------------------------------------------------------------
def _hash_bits_u32(shape, seed_u32, salt):
    """Deterministic per-element uint32 bits from (position, seed, salt)."""
    r = jax.lax.broadcasted_iota(jnp.uint32, shape, 0)
    c = jax.lax.broadcasted_iota(jnp.uint32, shape, 1)
    x = r * jnp.uint32(shape[1]) + c
    x = x + jnp.uint32(salt + 1) * jnp.uint32(0x9E3779B1)
    x = x ^ (seed_u32 * jnp.uint32(0x85EBCA6B))
    # murmur-style finalizer
    x = x ^ (x >> 16)
    x = x * jnp.uint32(0x7FEB352D)
    x = x ^ (x >> 15)
    x = x * jnp.uint32(0x846CA68B)
    x = x ^ (x >> 16)
    return x


# ---------------------------------------------------------------------------
# Pallas kernel: fused  dropout -> [fc1 -> ] relu -> dropout -> fc2
# grid axis 0 = dropout sample index (MC iterations fused into one launch)
# ---------------------------------------------------------------------------
def _classify_kernel(seed_ref, *refs, p, has_fc1):
    if has_fc1:
        x_ref, w1_ref, b1_ref, w2_ref, b2_ref, o_ref = refs
    else:
        x_ref, w2_ref, b2_ref, o_ref = refs

    x = x_ref[...].astype(jnp.float32)
    keep = 1.0 - p

    if p > 0.0:
        thr = jnp.uint32(min(int(round(p * 4294967296.0)), 4294967295))
        seed_u = (seed_ref[0] + pl.program_id(0)).astype(jnp.uint32)

        def keep_mask(shape, salt):
            return _hash_bits_u32(shape, seed_u, salt) >= thr

        m1 = keep_mask(x.shape, 0)

    if has_fc1:
        # general path (trained fc1): standard inverted dropout around the dot.
        if p > 0.0:
            x = jnp.where(m1, x * (1.0 / keep), 0.0)
        h = jnp.dot(x.astype(jnp.bfloat16), w1_ref[...],
                    preferred_element_type=jnp.float32) + b1_ref[...]
        h = jnp.maximum(h, 0.0)
        if p > 0.0:
            m2 = keep_mask(h.shape, 1)
            h = jnp.where(m2, h * (1.0 / keep), 0.0)
    else:
        # base-class fc1 is identity weight + zero bias: skip the matmul and
        # its weight stream, fold both inverted-dropout scales into one mul
        # (relu commutes with a {0,1} mask and a positive scale).
        h = jnp.maximum(x, 0.0)
        if p > 0.0:
            h = jnp.where(m1, h, 0.0)
            m2 = keep_mask(h.shape, 1)
            h = jnp.where(m2, h, 0.0)
            h = h * (1.0 / (keep * keep))

    out = jnp.dot(h.astype(jnp.bfloat16), w2_ref[...],
                  preferred_element_type=jnp.float32) + b2_ref[...]
    o_ref[...] = out[None, :, :]


def classify_pallas(x, w2, b2, *, p, seed, num_samples=1, w1=None, b1=None):
    """Fused classifier head.

    x:  (B, E) f32 features
    w2: (E, Cp) bf16 (Cp = classes padded to a multiple of 128), b2: (1, Cp) f32
    w1/b1: optional trained fc1 (E, E) bf16 / (1, E) f32; None => identity fc1.
    Returns (num_samples, B, Cp) f32 logits (one dropout sample per grid step).
    """
    B, E = x.shape
    Cp = w2.shape[1]
    has_fc1 = w1 is not None
    kernel = functools.partial(_classify_kernel, p=float(p), has_fc1=has_fc1)

    in_specs = [
        pl.BlockSpec(memory_space=pltpu.MemorySpace.SMEM),      # base seed
        pl.BlockSpec((B, E), lambda t: (0, 0)),                 # x
    ]
    args = [jnp.asarray([seed], jnp.int32), x]
    if has_fc1:
        in_specs += [pl.BlockSpec((E, E), lambda t: (0, 0)),    # w1
                     pl.BlockSpec((1, E), lambda t: (0, 0))]    # b1
        args += [w1, b1]
    in_specs += [pl.BlockSpec((E, Cp), lambda t: (0, 0)),       # w2
                 pl.BlockSpec((1, Cp), lambda t: (0, 0))]       # b2
    args += [w2, b2]

    return pl.pallas_call(
        kernel,
        grid=(num_samples,),
        out_shape=jax.ShapeDtypeStruct((num_samples, B, Cp), jnp.float32),
        in_specs=in_specs,
        out_specs=pl.BlockSpec((1, B, Cp), lambda t: (t, 0, 0)),
        compiler_params=pltpu.CompilerParams(
            dimension_semantics=("parallel",)),
    )(*args)


# ---------------------------------------------------------------------------
# UtilBase equivalent
# ---------------------------------------------------------------------------
class UtilBasePallas:
    def __init__(self, emb_size, num_classes, *, mc_iters=4, mc_dropout=0.25,
                 key=None):
        self.emb_size = emb_size
        self.num_classes = num_classes
        self.c_pad = ((num_classes + 127) // 128) * 128   # lane-dense output

        # init_classifier(): fc0 = Linear(E,E) eye weight / zero bias -> the
        # kernel specializes this identity layer away (fc1_identity=True).
        self.fc1_identity = True
        self.w1 = None
        self.b1 = None

        key = jax.random.PRNGKey(42) if key is None else key
        kw, kb = jax.random.split(key)
        bound = 1.0 / (emb_size ** 0.5)
        w2 = jax.random.uniform(kw, (emb_size, num_classes), jnp.float32,
                                -bound, bound)
        b2 = jax.random.uniform(kb, (1, num_classes), jnp.float32,
                                -bound, bound)
        pad = self.c_pad - num_classes
        self.w2 = jnp.pad(w2, ((0, 0), (0, pad))).astype(jnp.bfloat16)
        self.b2 = jnp.pad(b2, ((0, 0), (0, pad)))          # f32 bias

        self.mc_iters = mc_iters
        self.mc_dropout = mc_dropout

    def _classify(self, feats, p, seed, num_samples=1):
        w1 = None if self.fc1_identity else self.w1
        b1 = None if self.fc1_identity else self.b1
        return classify_pallas(feats, self.w2, self.b2, p=p, seed=seed,
                               num_samples=num_samples, w1=w1, b1=b1)

    def forward(self, img, phase, *, seed=0):
        # TODO(synk): feature_extractor is None in the base class; treated as
        # identity (flatten NCHW image to (B, E)).
        B = img.shape[0]
        C = self.num_classes
        feats = img.reshape(B, -1).astype(jnp.float32)

        mc_buffer = []
        if phase in ("ADAPTATION_TRAIN", "SOURCE_ONLY_TRAIN"):
            logits = self._classify(feats, 0.5, seed)[0, :, :C]
        elif phase == "MC_DROPOUT":
            # All mc_iters samples plus the final logits sample are computed
            # by ONE gridded pallas_call (grid=(mc_iters+1,)).
            out = self._classify(feats, self.mc_dropout, seed,
                                 num_samples=self.mc_iters + 1)
            mc_buffer = jnp.transpose(out[: self.mc_iters, :, :C],
                                      (1, 0, 2))            # (B, T, C)
            logits = out[self.mc_iters, :, :C]
        else:
            logits = self._classify(feats, 0.0, seed)[0, :, :C]
        return {"logits": logits, "features": feats, "mc_logits": mc_buffer}


# ---------------------------------------------------------------------------
# main
# ---------------------------------------------------------------------------
if __name__ == "__main__":
    key = jax.random.PRNGKey(0)
    # NCHW image: B=8, C=2, H=8, W=8  ->  emb_size = 2*8*8 = 128
    img = jax.random.normal(key, (8, 2, 8, 8), dtype=jnp.float32)
    emb_size, num_classes = 128, 16

    model = UtilBasePallas(emb_size, num_classes, mc_iters=4, mc_dropout=0.25)

    # ---- Inference path (dropout=0.0): check against a pure-JAX reference.
    out = model.forward(img, phase="INFERENCE")
    logits = jax.block_until_ready(out["logits"])
    assert logits.shape == (8, num_classes)

    feats = img.reshape(img.shape[0], -1)
    h_ref = jnp.maximum(feats, 0.0)                       # identity fc1 + ReLU
    ref = (jnp.dot(h_ref.astype(jnp.bfloat16), model.w2,
                   preferred_element_type=jnp.float32) + model.b2)[:, :num_classes]
    assert jnp.allclose(logits, ref, atol=1e-3, rtol=1e-3), "mismatch vs reference"

    # ---- General (non-identity-specialized) fc1 path with explicit eye/zero
    # weights must agree with the specialized path at p=0.
    w1_eye = jnp.eye(emb_size, dtype=jnp.bfloat16)
    b1_zero = jnp.zeros((1, emb_size), dtype=jnp.float32)
    gen = classify_pallas(feats, model.w2, model.b2, p=0.0, seed=0,
                          num_samples=1, w1=w1_eye, b1=b1_zero)
    gen = jax.block_until_ready(gen)[0, :, :num_classes]
    assert jnp.allclose(gen, logits, atol=1e-3, rtol=1e-3), "fc1 path mismatch"

    # ---- Training path (dropout=0.5).
    out_tr = model.forward(img, phase="ADAPTATION_TRAIN", seed=7)
    logits_tr = jax.block_until_ready(out_tr["logits"])
    assert logits_tr.shape == (8, num_classes)

    # ---- MC-dropout path: 4 samples + final logits fused into one kernel.
    out_mc = model.forward(img, phase="MC_DROPOUT", seed=11)
    mc = jax.block_until_ready(out_mc["mc_logits"])
    assert mc.shape == (8, 4, num_classes)
    # independent dropout masks per MC sample -> samples should differ
    assert bool(jnp.any(jnp.abs(mc[:, 0] - mc[:, 1]) > 1e-6)), "MC samples identical"

    print("KERNEL_OK")
</pallas_src>

<mosaic_0001>
module attributes {stable_mosaic.version = 11 : i64} {
  func.func @_classify_kernel(%arg0: i32, %arg1: memref<1xi32, #tpu.memory_space<smem>>, %arg2: memref<8x128xf32, #tpu.memory_space<vmem>>, %arg3: memref<128x128xbf16, #tpu.memory_space<vmem>>, %arg4: memref<1x128xf32, #tpu.memory_space<vmem>>, %arg5: memref<1x8x128xf32, #tpu.memory_space<vmem>>) attributes {dimension_semantics = [#tpu.dimension_semantics<parallel>], iteration_bounds = array<i64: 1>, scalar_prefetch = 0 : i64, scratch_operands = 0 : i64, tpu.core_type = #tpu.core_type<tc>, window_params = [{transform_indices = @transform_0, window_bounds = array<i64: 1>}, {pipeline_mode = #tpu.pipeline_mode<synchronous>, transform_indices = @transform_1, window_bounds = array<i64: 8, 128>}, {pipeline_mode = #tpu.pipeline_mode<synchronous>, transform_indices = @transform_2, window_bounds = array<i64: 128, 128>}, {pipeline_mode = #tpu.pipeline_mode<synchronous>, transform_indices = @transform_3, window_bounds = array<i64: 1, 128>}, {transform_indices = @transform_4, window_bounds = array<i64: 1, 8, 128>}]} {
    %c0 = arith.constant 0 : index
    %c0_0 = arith.constant 0 : index
    %0 = vector.load %arg2[%c0, %c0_0] : memref<8x128xf32, #tpu.memory_space<vmem>>, vector<8x128xf32>
    %cst = arith.constant 0.000000e+00 : f32
    %1 = vector.broadcast %cst : f32 to vector<8x128xf32>
    %2 = arith.maximumf %0, %1 : vector<8x128xf32>
    %3 = arith.truncf %2 : vector<8x128xf32> to vector<8x128xbf16>
    %c0_1 = arith.constant 0 : index
    %c0_2 = arith.constant 0 : index
    %4 = vector.load %arg3[%c0_1, %c0_2] : memref<128x128xbf16, #tpu.memory_space<vmem>>, vector<128x128xbf16>
    %cst_3 = arith.constant dense<0.000000e+00> : vector<8x128xf32>
    %5 = tpu.matmul %3, %4, %cst_3 {dimension_numbers = #tpu.dot_dimension_numbers<[1], [0], [0], [1], [0, 0, 1, 1], [], []>} : vector<8x128xbf16>, vector<128x128xbf16>, vector<8x128xf32> -> vector<8x128xf32>
    %c0_4 = arith.constant 0 : index
    %c0_5 = arith.constant 0 : index
    %6 = vector.load %arg4[%c0_4, %c0_5] : memref<1x128xf32, #tpu.memory_space<vmem>>, vector<1x128xf32>
    %7 = vector.broadcast %6 : vector<1x128xf32> to vector<8x128xf32>
    %8 = arith.addf %5, %7 : vector<8x128xf32>
    %9 = vector.shape_cast %8 : vector<8x128xf32> to vector<1x8x128xf32>
    %c0_6 = arith.constant 0 : index
    %c0_7 = arith.constant 0 : index
    %c0_8 = arith.constant 0 : index
    %10 = vector.load %arg5[%c0_6, %c0_7, %c0_8] : memref<1x8x128xf32, #tpu.memory_space<vmem>>, vector<1x8x128xf32>
    tpu.vector_store %arg5[%c0_6, %c0_7, %c0_8], %9 {strides = array<i32>} : memref<1x8x128xf32, #tpu.memory_space<vmem>>, vector<1x8x128xf32>,
    return
  }
  func.func @transform_0(%arg0: i32) -> i32 {
    %c0_i32 = arith.constant 0 : i32
    %c0_i32_0 = arith.constant 0 : i32
    return %c0_i32 : i32
  }
  func.func @transform_1(%arg0: i32) -> (i32, i32) {
    %c0_i32 = arith.constant 0 : i32
    %c0_i32_0 = arith.constant 0 : i32
    %c0_i32_1 = arith.constant 0 : i32
    return %c0_i32, %c0_i32_0 : i32, i32
  }
  func.func @transform_2(%arg0: i32) -> (i32, i32) {
    %c0_i32 = arith.constant 0 : i32
    %c0_i32_0 = arith.constant 0 : i32
    %c0_i32_1 = arith.constant 0 : i32
    return %c0_i32, %c0_i32_0 : i32, i32
  }
  func.func @transform_3(%arg0: i32) -> (i32, i32) {
    %c0_i32 = arith.constant 0 : i32
    %c0_i32_0 = arith.constant 0 : i32
    %c0_i32_1 = arith.constant 0 : i32
    return %c0_i32, %c0_i32_0 : i32, i32
  }
  func.func @transform_4(%arg0: i32) -> (i32, i32, i32) {
    %c0_i32 = arith.constant 0 : i32
    %c0_i32_0 = arith.constant 0 : i32
    %c0_i32_1 = arith.constant 0 : i32
    return %arg0, %c0_i32, %c0_i32_0 : i32, i32, i32
  }
}

</mosaic_0001>

<llo_original>
// kernel: tpu_custom_call.1
$region0: #{tpu_custom_call.1}
  #allocation0 [shape = 'u32[]', space=smem, size = 0x4, offset = 0x4, fixed_abs, tag = 'smem constant byte address 0x4 - core index']
  #allocation1 [shape = 'u32[72,128]{1,0:T(1,128)}', space=vmem, size = 0x9000, scoped, tag = 'internal scratch']
  #allocation2 [shape = 's32[1]{0:T(128)S(6)}', space=smem, size = 0x200, scoped, tag = 'scoped memory for tpu_custom_call.1']
  %s0 = inlined_call_operand.<no memory space> [shape: s32[1], index: 0, kind: input, shape index: {}]
  %s1 = inlined_call_operand.hbm [shape: f32[8,128], index: 1, kind: input, shape index: {}]
  %s2 = inlined_call_operand.hbm [shape: bf16[128,128], index: 2, kind: input, shape index: {}]
  %s3 = inlined_call_operand.vmem [shape: f32[1,128], index: 3, kind: input, shape index: {}]
  %s4 = inlined_call_operand.hbm [shape: f32[1,8,128], index: 4, kind: output, shape index: {}]
  %s5 = sld [smem:[#allocation0]]
  $region34: #{tpu_custom_call.1} parent=0
    _
  %s7 = ssub.s32 1, %s5
  %s8 = scalar_select 0, %s7, %s5
  %9 = sst [smem:[#allocation2]] %s0
  $region1: #{tpu_custom_call.1} parent=0
    #allocation3 [shape = 'u8[4096]{0}', space=vmem, size = 0x1000, scoped, tag = 'input window, operand 1, single buffered']
    #allocation4 [shape = 's32[1]{0}', space=sflag, size = 0x4, scoped, tag = 'scoped memory for tpu_custom_call.1']
    #allocation5 [shape = 's32[1]{0}', space=sflag, size = 0x4, scoped, tag = 'scoped memory for tpu_custom_call.1']
    #allocation6 [shape = 'u8[32768]{0}', space=vmem, size = 0x8000, scoped, tag = 'input window, operand 2, single buffered']
    #allocation7 [shape = 's32[1]{0}', space=sflag, size = 0x4, scoped, tag = 'scoped memory for tpu_custom_call.1']
    #allocation8 [shape = 'u8[4096]{0}', space=vmem, size = 0x1000, scoped, tag = 'output window, operand 0, single buffered']
    %10 = vsyncpa [#allocation4], 0
    %11 = vsyncpa [#allocation7], 0
    %12 = vsyncpa [#allocation5], 0
    // Predicated region
    $region2: #{tpu_custom_call.1} parent=1 // pred_check
      _
    $region3: #{tpu_custom_call.1} parent=1 // pred_check_branch
      %14 = sbr.rel (0) target = $region5
    $region4: #{tpu_custom_call.1} parent=1 // pred_region
      _
    $region5: #{tpu_custom_call.1} parent=1 // pred_fallthru
      _
    // Predicated region
    $region6: #{tpu_custom_call.1} parent=1 // pred_check
      _
    $region7: #{tpu_custom_call.1} parent=1 // pred_check_branch
      %16 = sbr.rel (0) target = $region9
    $region8: #{tpu_custom_call.1} parent=1 // pred_region
      %18 = vsyncadd [#allocation4], 0
      %s20 = sshll.u32 %s1, 4
      %s21 = int_to_ptr.hbm [resolvable:$true] %s20
      %s22 = sshll.u32 [#allocation3], 4
      %s23 = int_to_ptr.vmem [resolvable:$true] %s22
      %25 = dma.hbm_to_vmem [thread:$0]  %s21, 128, %s23, [#allocation4]
    $region9: #{tpu_custom_call.1} parent=1 // pred_fallthru
      _
    // Predicated region
    $region10: #{tpu_custom_call.1} parent=1 // pred_check
      _
    $region11: #{tpu_custom_call.1} parent=1 // pred_check_branch
      %27 = sbr.rel (0) target = $region13
    $region12: #{tpu_custom_call.1} parent=1 // pred_region
      %29 = vsyncadd [#allocation7], 0
      %s30 = sshll.u32 %s2, 4
      %s31 = int_to_ptr.hbm [resolvable:$true] %s30
      %s32 = sshll.u32 [#allocation6], 4
      %s33 = int_to_ptr.vmem [resolvable:$true] %s32
      %38 = dma.hbm_to_vmem [thread:$0]  %s31, 1024, %s33, [#allocation7], 64, 64, 4
    $region13: #{tpu_custom_call.1} parent=1 // pred_fallthru
      _
    // Predicated region
    $region14: #{tpu_custom_call.1} parent=1 // pred_check
      _
    $region15: #{tpu_custom_call.1} parent=1 // pred_check_branch
      %40 = sbr.rel (0) target = $region17
    $region16: #{tpu_custom_call.1} parent=1 // pred_region
      _
    $region17: #{tpu_custom_call.1} parent=1 // pred_fallthru
      _
    // Predicated region
    $region18: #{tpu_custom_call.1} parent=1 // pred_check
      _
    $region19: #{tpu_custom_call.1} parent=1 // pred_check_branch
      %42 = sbr.rel (0) target = $region21
    $region20: #{tpu_custom_call.1} parent=1 // pred_region
      %44 = dma.done [#allocation4], 128
    $region21: #{tpu_custom_call.1} parent=1 // pred_fallthru
      _
    // Predicated region
    $region22: #{tpu_custom_call.1} parent=1 // pred_check
      _
    $region23: #{tpu_custom_call.1} parent=1 // pred_check_branch
      %46 = sbr.rel (0) target = $region25
    $region24: #{tpu_custom_call.1} parent=1 // pred_region
      %48 = dma.done [#allocation7], 1024
    $region25: #{tpu_custom_call.1} parent=1 // pred_fallthru
      _
    %v49 = vld [vmem:[#allocation3] sm:$0xff]
    %v50 = vmax.f32 %v49, 0.0
    %v51 = vpack.c.bf16 %v50, %v50
    %v52 = vld [vmem:[#allocation6] sm:$0xf]
    %v53 = vld [vmem:[#allocation6 + $0x4] sm:$0xf]
    %v54 = vld [vmem:[#allocation6 + $0x8] sm:$0xf]
    %v55 = vld [vmem:[#allocation6 + $0xc] sm:$0xf]
    %v56 = vld [vmem:[#allocation6 + $0x10] sm:$0xf]
    %v57 = vld [vmem:[#allocation6 + $0x14] sm:$0xf]
    %v58 = vld [vmem:[#allocation6 + $0x18] sm:$0xf]
    %v59 = vld [vmem:[#allocation6 + $0x1c] sm:$0xf]
    %v60 = vld [vmem:[#allocation6 + $0x20] sm:$0xf]
    %v61 = vld [vmem:[#allocation6 + $0x24] sm:$0xf]
    %v62 = vld [vmem:[#allocation6 + $0x28] sm:$0xf]
    %v63 = vld [vmem:[#allocation6 + $0x2c] sm:$0xf]
    %v64 = vld [vmem:[#allocation6 + $0x30] sm:$0xf]
    %v65 = vld [vmem:[#allocation6 + $0x34] sm:$0xf]
    %v66 = vld [vmem:[#allocation6 + $0x38] sm:$0xf]
    %v67 = vld [vmem:[#allocation6 + $0x3c] sm:$0xf]
    %v68 = vld [vmem:[%s3] sm:$0x1]
    %v70 = vperm.slane %v68, 0
    %v88 = vunpack.c.l.b16 %v52
    %v89 = vunpack.c.l.b16 %v53
    %v90 = vunpack.c.l.b16 %v54
    %v91 = vunpack.c.l.b16 %v55
    %v92 = vunpack.c.l.b16 %v56
    %v93 = vunpack.c.l.b16 %v57
    %v94 = vunpack.c.l.b16 %v58
    %v95 = vunpack.c.l.b16 %v59
    %v96 = vunpack.c.l.b16 %v60
    %v97 = vunpack.c.l.b16 %v61
    %v98 = vunpack.c.l.b16 %v62
    %v99 = vunpack.c.l.b16 %v63
    %v100 = vunpack.c.l.b16 %v64
    %v101 = vunpack.c.l.b16 %v65
    %v102 = vunpack.c.l.b16 %v66
    %v103 = vunpack.c.l.b16 %v67
    %v104 = vpack.c.b16 %v89, %v88
    %v105 = vpack.c.b16 %v91, %v90
    %v106 = vpack.c.b16 %v93, %v92
    %v107 = vpack.c.b16 %v95, %v94
    %v108 = vpack.c.b16 %v97, %v96
    %v109 = vpack.c.b16 %v99, %v98
    %v110 = vpack.c.b16 %v101, %v100
    %v111 = vpack.c.b16 %v103, %v102
    %120 = vmatpush.bf16.msra.mxu0 %v111
    %121 = vmatpush.bf16.msra.mxu0 %v110
    %122 = vmatpush.bf16.msra.mxu0 %v109
    %123 = vmatpush.bf16.msra.mxu0 %v108
    %124 = vmatpush.bf16.msra.mxu0 %v107
    %125 = vmatpush.bf16.msra.mxu0 %v106
    %126 = vmatpush.bf16.msra.mxu0 %v105
    %127 = vmatpush.bf16.msra.mxu0 %v104
    %128 = vmatmul.bf16.gmra.mxu0 %v51
    %v129 = vpop.f32.mrf.mxu0
    %v130 = vadd.f32 %v70, %v129
    %v131 = vpop.f32.mrf.mxu0
    %132 = vdwg.mxu0
    %133 = vst [vmem:[#allocation8] sm:$0xff] %v130
    // Predicated region
    $region26: #{tpu_custom_call.1} parent=1 // pred_check
      _
    $region27: #{tpu_custom_call.1} parent=1 // pred_check_branch
      %135 = sbr.rel (0) target = $region29
    $region28: #{tpu_custom_call.1} parent=1 // pred_region
      %137 = vsyncadd [#allocation5], 0
      %s139 = sshll.u32 [#allocation8], 4
      %s140 = int_to_ptr.vmem [resolvable:$true] %s139
      %s141 = sshll.u32 %s4, 4
      %s142 = int_to_ptr.hbm [resolvable:$true] %s141
      %144 = dma.vmem_to_hbm [thread:$0]  %s140, 128, %s142, [#allocation5]
    $region29: #{tpu_custom_call.1} parent=1 // pred_fallthru
      _
    // Predicated region
    $region30: #{tpu_custom_call.1} parent=1 // pred_check
      _
    $region31: #{tpu_custom_call.1} parent=1 // pred_check_branch
      %146 = sbr.rel (0) target = $region33
    $region32: #{tpu_custom_call.1} parent=1 // pred_region
      %148 = dma.done [#allocation5], 128
    $region33: #{tpu_custom_call.1} parent=1 // pred_fallthru
      _
    %149 = vsyncpa [#allocation4], 1
    %150 = vsyncpa [#allocation7], 1
    %151 = vsyncpa [#allocation5], 1

</llo_original>
